<compile_context>
chip_gen: v7x
topology: tpu7x:2x2x1
jax: 0.10.0
libtpu: 0.0.40
codegen_flags: <defaults>
</compile_context>

<pallas_src>
import math
import functools

import jax
import jax.numpy as jnp
from jax.experimental import pallas as pl
from jax.experimental.pallas import tpu as pltpu


def _make_pos_embedding(emb_size: int, max_length: int) -> jnp.ndarray:
    """Identical construction to the PyTorch __init__ (sin on even, cos on odd cols)."""
    den = jnp.exp(-jnp.arange(0, emb_size, 2, dtype=jnp.float32)
                  * math.log(10000.0) / emb_size)               # (emb_size//2,)
    pos = jnp.arange(0, max_length, dtype=jnp.float32)[:, None]  # (max_length, 1)
    arg = pos * den[None, :]                                     # (max_length, emb_size//2)
    pe = jnp.zeros((max_length, emb_size), dtype=jnp.float32)
    pe = pe.at[:, 0::2].set(jnp.sin(arg))
    pe = pe.at[:, 1::2].set(jnp.cos(arg))
    return pe


def _pos_enc_kernel(seed_ref, emb_ref, pos_ref, out_ref, *, dropout_p, training):
    # emb_ref/out_ref blocks are (TS, E): the batch dim is squeezed by the BlockSpec,
    # so no explicit broadcast temp is materialized for the pos tile.
    x = emb_ref[...] + pos_ref[...]

    if training and dropout_p > 0.0:
        ts, e = x.shape
        # Unique per-grid-step id so tiling never replays the same dropout mask.
        tile_id = pl.program_id(0) * pl.num_programs(1) + pl.program_id(1)
        row = jax.lax.broadcasted_iota(jnp.uint32, (ts, e), 0)
        col = jax.lax.broadcasted_iota(jnp.uint32, (ts, e), 1)
        h = row * jnp.uint32(e) + col
        h = h ^ (seed_ref[0].astype(jnp.uint32)
                 + jnp.uint32(0x9E3779B9) * tile_id.astype(jnp.uint32))
        # murmur3-style finalizer -> well-mixed 32 pseudo-random bits per element.
        h = h ^ (h >> 16)
        h = h * jnp.uint32(0x7FEB352D)
        h = h ^ (h >> 15)
        h = h * jnp.uint32(0x846CA68B)
        h = h ^ (h >> 16)
        # Integer-domain threshold on the top 24 bits: P(keep) = 1 - p.
        thresh = jnp.int32(int(round(dropout_p * (1 << 24))))
        keep = (h >> 8).astype(jnp.int32) >= thresh
        scale = 1.0 / (1.0 - dropout_p)   # inverted dropout scaling
        x = jnp.where(keep, x * scale, jnp.zeros_like(x))

    out_ref[...] = x.astype(out_ref.dtype)


def _choose_s_tile(S, E, itemsize, target_bytes=2 * 1024 * 1024):
    """Pick an S-tile so one (TS, E) tile is ~2 MiB, TS a multiple of 8 (or full S)."""
    ts = target_bytes // max(1, E * itemsize)
    ts = max(8, (ts // 8) * 8)
    return S if ts >= S else ts


def positional_encoding(embedding, pos_embedding, *, dropout_p=0.1,
                        training=True, seed=0):
    """embedding: (B, S, E); pos_embedding: (max_length, E).  Returns (B, S, E)."""
    B, S, E = embedding.shape
    # Same semantics as torch's self.pos_embedding[:, :token_len, :]; keep compute in
    # the embedding dtype (bf16 stays bf16 on v6e/v7x; fp32 stays fp32).
    pe = pos_embedding[:S, :].astype(embedding.dtype)
    seed_arr = jnp.array([seed], dtype=jnp.int32)

    ts = _choose_s_tile(S, E, embedding.dtype.itemsize)
    # S-tiles outer, batch inner: the pos tile index is constant across the inner axis,
    # so its DMA is reused for every batch step of the same S-tile.
    grid = (pl.cdiv(S, ts), B)

    kernel = functools.partial(_pos_enc_kernel, dropout_p=float(dropout_p),
                               training=bool(training))

    return pl.pallas_call(
        kernel,
        out_shape=jax.ShapeDtypeStruct((B, S, E), embedding.dtype),
        grid_spec=pltpu.PrefetchScalarGridSpec(
            num_scalar_prefetch=1,          # seed lands in SMEM
            grid=grid,
            in_specs=[
                # batch dim squeezed -> kernel sees (ts, E)
                pl.BlockSpec((None, ts, E), lambda si, bi, seed: (bi, si, 0)),
                pl.BlockSpec((ts, E), lambda si, bi, seed: (si, 0)),
            ],
            out_specs=pl.BlockSpec((None, ts, E), lambda si, bi, seed: (bi, si, 0)),
        ),
        compiler_params=pltpu.CompilerParams(
            dimension_semantics=("parallel", "parallel")),
        # TODO(synk): input_output_aliases={1: 0} (embedding -> output) would cut HBM
        # footprint on 16 GiB v5e; omitted to keep the call maximally portable.
    )(seed_arr, embedding, pe)


if __name__ == "__main__":
    key = jax.random.PRNGKey(0)
    B, S, E = 2, 8, 32
    max_length = 64
    p = 0.1

    embedding = jax.random.normal(key, (B, S, E), dtype=jnp.float32)
    pos_embedding = _make_pos_embedding(E, max_length)
    ref = embedding + pos_embedding[None, :S, :]

    # Training-mode forward (fused add + inverted dropout) in the Pallas kernel.
    out_train = positional_encoding(embedding, pos_embedding,
                                    dropout_p=p, training=True, seed=1234)
    out_train = jax.block_until_ready(out_train)
    assert out_train.shape == (B, S, E)
    # Every element must be either dropped (0) or kept and scaled by 1/(1-p).
    kept = jnp.isclose(out_train, ref / (1.0 - p), atol=1e-5)
    dropped = jnp.isclose(out_train, 0.0, atol=1e-6)
    assert bool(jnp.all(kept | dropped)), "training-mode dropout values mismatch"

    # Eval-mode (dropout == identity) check against a pure-JAX reference.
    out_eval = positional_encoding(embedding, pos_embedding,
                                   dropout_p=p, training=False)
    out_eval = jax.block_until_ready(out_eval)
    assert jnp.allclose(out_eval, ref, atol=1e-6), "eval-mode mismatch vs reference"

    print("KERNEL_OK")
</pallas_src>

<mosaic_0001>
module attributes {stable_mosaic.version = 11 : i64} {
  func.func @_pos_enc_kernel(%arg0: i32, %arg1: i32, %arg2: memref<1xi32, #tpu.memory_space<smem>>, %arg3: memref<1x8x32xf32, #tpu.memory_space<vmem>>, %arg4: memref<8x32xf32, #tpu.memory_space<vmem>>, %arg5: memref<1x8x32xf32, #tpu.memory_space<vmem>>) attributes {dimension_semantics = [#tpu.dimension_semantics<parallel>, #tpu.dimension_semantics<parallel>], iteration_bounds = array<i64: 1, 2>, scalar_prefetch = 1 : i64, scratch_operands = 0 : i64, tpu.core_type = #tpu.core_type<tc>, window_params = [{transform_indices = @transform_0, window_bounds = array<i64: 1, 8, 32>}, {transform_indices = @transform_1, window_bounds = array<i64: 8, 32>}, {transform_indices = @transform_2, window_bounds = array<i64: 1, 8, 32>}]} {
    %c0 = arith.constant 0 : index
    %c0_0 = arith.constant 0 : index
    %c0_1 = arith.constant 0 : index
    %0 = vector.load %arg3[%c0, %c0_0, %c0_1] : memref<1x8x32xf32, #tpu.memory_space<vmem>>, vector<1x8x32xf32>
    %1 = vector.shape_cast %0 : vector<1x8x32xf32> to vector<8x32xf32>
    %c0_2 = arith.constant 0 : index
    %c0_3 = arith.constant 0 : index
    %2 = vector.load %arg4[%c0_2, %c0_3] : memref<8x32xf32, #tpu.memory_space<vmem>>, vector<8x32xf32>
    %3 = arith.addf %1, %2 : vector<8x32xf32>
    %c2_i32 = arith.constant 2 : i32
    %4 = arith.muli %arg0, %c2_i32 : i32
    %5 = arith.addi %4, %arg1 : i32
    %6 = tpu.iota {dimensions = array<i32: 0>} : vector<8x32xi32>
    %7 = tpu.iota {dimensions = array<i32: 1>} : vector<8x32xi32>
    %c32_i32 = arith.constant 32 : i32
    %8 = vector.broadcast %c32_i32 : i32 to vector<8x32xi32>
    %9 = arith.muli %6, %8 : vector<8x32xi32>
    %10 = arith.addi %9, %7 : vector<8x32xi32>
    %c0_4 = arith.constant 0 : index
    %11 = memref.load %arg2[%c0_4] : memref<1xi32, #tpu.memory_space<smem>>
    %c-1640531527_i32 = arith.constant -1640531527 : i32
    %12 = arith.muli %c-1640531527_i32, %5 : i32
    %13 = arith.addi %11, %12 : i32
    %14 = vector.broadcast %13 : i32 to vector<8x32xi32>
    %15 = arith.xori %10, %14 : vector<8x32xi32>
    %c16_i32 = arith.constant 16 : i32
    %16 = vector.broadcast %c16_i32 : i32 to vector<8x32xi32>
    %17 = arith.shrui %15, %16 : vector<8x32xi32>
    %18 = arith.xori %15, %17 : vector<8x32xi32>
    %c2146121005_i32 = arith.constant 2146121005 : i32
    %19 = vector.broadcast %c2146121005_i32 : i32 to vector<8x32xi32>
    %20 = arith.muli %18, %19 : vector<8x32xi32>
    %c15_i32 = arith.constant 15 : i32
    %21 = vector.broadcast %c15_i32 : i32 to vector<8x32xi32>
    %22 = arith.shrui %20, %21 : vector<8x32xi32>
    %23 = arith.xori %20, %22 : vector<8x32xi32>
    %c-2073254261_i32 = arith.constant -2073254261 : i32
    %24 = vector.broadcast %c-2073254261_i32 : i32 to vector<8x32xi32>
    %25 = arith.muli %23, %24 : vector<8x32xi32>
    %c16_i32_5 = arith.constant 16 : i32
    %26 = vector.broadcast %c16_i32_5 : i32 to vector<8x32xi32>
    %27 = arith.shrui %25, %26 : vector<8x32xi32>
    %28 = arith.xori %25, %27 : vector<8x32xi32>
    %c8_i32 = arith.constant 8 : i32
    %29 = vector.broadcast %c8_i32 : i32 to vector<8x32xi32>
    %30 = arith.shrui %28, %29 : vector<8x32xi32>
    %c1677722_i32 = arith.constant 1677722 : i32
    %31 = vector.broadcast %c1677722_i32 : i32 to vector<8x32xi32>
    %32 = arith.cmpi sge, %30, %31 : vector<8x32xi32>
    %cst = arith.constant 1.11111116 : f32
    %33 = vector.broadcast %cst : f32 to vector<8x32xf32>
    %34 = arith.mulf %3, %33 : vector<8x32xf32>
    %cst_6 = arith.constant 0.000000e+00 : f32
    %35 = vector.broadcast %cst_6 : f32 to vector<8x32xf32>
    %36 = arith.select %32, %34, %35 : vector<8x32xi1>, vector<8x32xf32>
    %c0_7 = arith.constant 0 : index
    %c0_8 = arith.constant 0 : index
    %c0_9 = arith.constant 0 : index
    %37 = vector.load %arg5[%c0_7, %c0_8, %c0_9] : memref<1x8x32xf32, #tpu.memory_space<vmem>>, vector<1x8x32xf32>
    %38 = vector.shape_cast %37 : vector<1x8x32xf32> to vector<8x32xf32>
    %39 = vector.shape_cast %36 : vector<8x32xf32> to vector<1x8x32xf32>
    tpu.vector_store %arg5[%c0_7, %c0_8, %c0_9], %39 {strides = array<i32>} : memref<1x8x32xf32, #tpu.memory_space<vmem>>, vector<1x8x32xf32>,
    return
  }
  func.func @transform_0(%arg0: i32, %arg1: i32, %arg2: memref<1xi32, #tpu.memory_space<smem>>) -> (i32, i32, i32) {
    %c0_i32 = arith.constant 0 : i32
    %c0_i32_0 = arith.constant 0 : i32
    return %arg1, %arg0, %c0_i32 : i32, i32, i32
  }
  func.func @transform_1(%arg0: i32, %arg1: i32, %arg2: memref<1xi32, #tpu.memory_space<smem>>) -> (i32, i32) {
    %c0_i32 = arith.constant 0 : i32
    %c0_i32_0 = arith.constant 0 : i32
    return %arg0, %c0_i32 : i32, i32
  }
  func.func @transform_2(%arg0: i32, %arg1: i32, %arg2: memref<1xi32, #tpu.memory_space<smem>>) -> (i32, i32, i32) {
    %c0_i32 = arith.constant 0 : i32
    %c0_i32_0 = arith.constant 0 : i32
    return %arg1, %arg0, %c0_i32 : i32, i32, i32
  }
}

</mosaic_0001>

<llo_original>
// kernel: tpu_custom_call.1
$region0: #{tpu_custom_call.1}
  #allocation0 [shape = 'u32[]', space=smem, size = 0x4, offset = 0x4, fixed_abs, tag = 'smem constant byte address 0x4 - core index']
  #allocation1 [shape = 'u32[144,128]{1,0:T(1,128)}', space=vmem, size = 0x12000, scoped, tag = 'internal scratch']
  #allocation2 [shape = 's32[1]{0}', space=sflag, size = 0x4, scoped, tag = 'scoped memory for tpu_custom_call.1']
  #allocation3 [shape = 's32[1]{0:T(128)S(6)}', space=smem, size = 0x200, scoped, tag = 'prefetched SMEM operand 0']
  %s0 = inlined_call_operand.<no memory space> [shape: s32[1], index: 0, kind: input, shape index: {}]
  %s1 = inlined_call_operand.hbm [shape: f32[2,8,32], index: 1, kind: input, shape index: {}]
  %s2 = inlined_call_operand.hbm [shape: f32[8,32], index: 2, kind: input, shape index: {}]
  %s3 = inlined_call_operand.hbm [shape: f32[2,8,32], index: 3, kind: output, shape index: {}]
  %s4 = sld [smem:[#allocation0]]
  $region49: #{tpu_custom_call.1} parent=0
    _
  %s6 = ssub.s32 1, %s4
  %s7 = scalar_select 0, %s6, %s4
  %8 = sst [smem:[#allocation3]] %s0
  $region1: #{tpu_custom_call.1} parent=0
    #allocation4 [shape = 'u8[8192]{0}', space=vmem, size = 0x2000, scoped, tag = 'input window, operand 1']
    #allocation5 [shape = 's32[2]{0}', space=sflag, size = 0x8, scoped, tag = 'scoped memory for tpu_custom_call.1']
    #allocation6 [shape = 's32[2]{0}', space=sflag, size = 0x8, scoped, tag = 'scoped memory for tpu_custom_call.1']
    #allocation7 [shape = 'u8[4096]{0}', space=vmem, size = 0x1000, scoped, tag = 'input window, operand 2, single buffered']
    #allocation8 [shape = 's32[1]{0}', space=sflag, size = 0x4, scoped, tag = 'scoped memory for tpu_custom_call.1']
    #allocation9 [shape = 'u8[8192]{0}', space=vmem, size = 0x2000, scoped, tag = 'output window, operand 0']
    %9 = vsyncpa [#allocation5], 0
    %s10 = scalar_lea.sflag [#allocation5], 1
    %11 = vsyncpa %s10, 0
    %12 = vsyncpa [#allocation8], 0
    %13 = vsyncpa [#allocation6], 0
    %s14 = scalar_lea.sflag [#allocation6], 1
    %15 = vsyncpa %s14, 0
    loop: start=0, step=1, limit=4
    $region2: #{tpu_custom_call.1} parent=1 // loop_pre_header
      _
    $region3: #{tpu_custom_call.1} parent=1 // loop_header
      %s17 = sphi 0, %s21
      %p18 = scmp.ge.s32.totalorder %s17, 4
      %s24 = sphi 0, %s36
      %s25 = sphi 0, %s32
      %s26 = sphi 0, %s24
      %s27 = sphi 0, %s25
      %s28 = sphi 0, %s26
      %s29 = sphi 0, %s27
      %s41 = sphi 0, %s43
      %s44 = sphi 0, %s41
      %s45 = sphi 0, %s44
      %s61 = sphi 0, %s45
      %s67 = sphi 0, %s69
      %s70 = sphi 0, %s67
      %s71 = sphi 0, %s70
      %s87 = sphi 0, %s71
      %s95 = sphi 0, %s97
      %s98 = sphi 0, %s95
      %s99 = sphi 0, %s98
      %s115 = sphi 0, %s99
    $region4: #{tpu_custom_call.1} parent=1 // loop_header_branch
      %20 = sbr.rel (%p18) target = $region8
    $region5: #{tpu_custom_call.1} parent=1 // loop_body
      %s22 = ssub.s32 %s17, 1
      %s23 = ssub.s32 %s17, 2
      %s30 = sadd.s32 1, %s25
      %p31 = scmp.ge.s32.totalorder %s30, 2
      %s32 = scalar_select %p31, 0, %s30
      %s33 = sadd.s32 1, %s24
      %s34 = scalar_select %p31, %s33, %s24
      %p35 = scmp.ge.s32.totalorder %s34, 1
      %s36 = scalar_select %p35, 0, %s34
      %s37 = ssub.s32 %s25, %s32
      %s38 = ssub.s32 %s24, %s36
      %s39 = sor.u32 %s37, %s38
      %p40 = scmp.eq.s32.totalorder %s39, 0
      %s42 = sadd.s32 %s41, 1
      %s43 = scalar_select %p40, %s41, %s42
      %p46 = pneg %p40
      %p47 = scmp.eq.s32.totalorder %s17, 1
      %p48 = por %p46, %p47
      %p49 = scmp.ne.s32.totalorder %s41, %s44
      %p50 = scmp.eq.s32.totalorder %s17, 0
      %p51 = por %p49, %p50
      %p52 = scmp.ne.s32.totalorder %s41, %s44
      %p53 = scmp.eq.s32.totalorder %s22, 1
      %p54 = por %p52, %p53
      %p55 = scmp.ne.s32.totalorder %s44, %s45
      %p56 = scmp.eq.s32.totalorder %s22, 0
      %p57 = por %p55, %p56
      %p58 = scmp.ne.s32.totalorder %s44, %s45
      %p59 = scmp.eq.s32.totalorder %s23, 1
      %p60 = por %p58, %p59
      %p62 = scmp.ne.s32.totalorder %s45, %s61
      %p63 = scmp.eq.s32.totalorder %s23, 0
      %p64 = por %p62, %p63
      %s65 = ssub.s32 %s24, %s36
      %p66 = scmp.eq.s32.totalorder %s65, 0
      %s68 = sadd.s32 %s67, 1
      %s69 = scalar_select %p66, %s67, %s68
      %p72 = pneg %p66
      %p73 = scmp.eq.s32.totalorder %s17, 1
      %p74 = por %p72, %p73
      %p75 = scmp.ne.s32.totalorder %s67, %s70
      %p76 = scmp.eq.s32.totalorder %s17, 0
      %p77 = por %p75, %p76
      %p78 = scmp.ne.s32.totalorder %s67, %s70
      %p79 = scmp.eq.s32.totalorder %s22, 1
      %p80 = por %p78, %p79
      %p81 = scmp.ne.s32.totalorder %s70, %s71
      %p82 = scmp.eq.s32.totalorder %s22, 0
      %p83 = por %p81, %p82
      %p84 = scmp.ne.s32.totalorder %s70, %s71
      %p85 = scmp.eq.s32.totalorder %s23, 1
      %p86 = por %p84, %p85
      %p88 = scmp.ne.s32.totalorder %s71, %s87
      %p89 = scmp.eq.s32.totalorder %s23, 0
      %p90 = por %p88, %p89
      %s91 = ssub.s32 %s25, %s32
      %s92 = ssub.s32 %s24, %s36
      %s93 = sor.u32 %s91, %s92
      %p94 = scmp.eq.s32.totalorder %s93, 0
      %s96 = sadd.s32 %s95, 1
      %s97 = scalar_select %p94, %s95, %s96
      %p100 = pneg %p94
      %p101 = scmp.eq.s32.totalorder %s17, 1
      %p102 = por %p100, %p101
      %p103 = scmp.ne.s32.totalorder %s95, %s98
      %p104 = scmp.eq.s32.totalorder %s17, 0
      %p105 = por %p103, %p104
      %p106 = scmp.ne.s32.totalorder %s95, %s98
      %p107 = scmp.eq.s32.totalorder %s22, 1
      %p108 = por %p106, %p107
      %p109 = scmp.ne.s32.totalorder %s98, %s99
      %p110 = scmp.eq.s32.totalorder %s22, 0
      %p111 = por %p109, %p110
      %p112 = scmp.ne.s32.totalorder %s98, %s99
      %p113 = scmp.eq.s32.totalorder %s23, 1
      %p114 = por %p112, %p113
      %p116 = scmp.ne.s32.totalorder %s99, %s115
      %p117 = scmp.eq.s32.totalorder %s23, 0
      %p118 = por %p116, %p117
      %p119 = scmp.le.s32.totalorder 1, %s17
      %p120 = scmp.lt.s32.totalorder %s17, 3
      %p121 = pnand %p119, %p120
      %p122 = pneg %p121
      // Predicated region
      $region9: #{tpu_custom_call.1} parent=5 // pred_check
        _
      $region10: #{tpu_custom_call.1} parent=5 // pred_check_branch
        %124 = sbr.rel (%p121) target = $region12
      $region11: #{tpu_custom_call.1} parent=5 // pred_region
        %s125 = ssub.s32 %s17, 1
        // Predicated region
        $region13: #{tpu_custom_call.1} parent=11 // pred_check
          %p126 = pneg %p83
        $region14: #{tpu_custom_call.1} parent=11 // pred_check_branch
          %128 = sbr.rel (%p126) target = $region16
        $region15: #{tpu_custom_call.1} parent=11 // pred_region
          %s130 = ssub.s32 128, 128
          %131 = vsyncadd [#allocation8], %s130
          %s132 = smul.addr %s26, 128
          %s133 = scalar_lea.hbm %s2, %s132
          %s135 = sshll.u32 [#allocation7], 4
          %s136 = int_to_ptr.vmem [resolvable:$true] %s135
          %138 = dma.hbm_to_vmem [thread:$0]  %s133, 128, %s136, [#allocation8]
        $region16: #{tpu_custom_call.1} parent=11 // pred_fallthru
          _
      $region12: #{tpu_custom_call.1} parent=5 // pred_fallthru
        _
      %p139 = scmp.lt.s32.totalorder %s17, 2
      // Predicated region
      $region17: #{tpu_custom_call.1} parent=5 // pred_check
        %p140 = pneg %p139
      $region18: #{tpu_custom_call.1} parent=5 // pred_check_branch
        %142 = sbr.rel (%p140) target = $region20
      $region19: #{tpu_custom_call.1} parent=5 // pred_region
        // Predicated region
        $region21: #{tpu_custom_call.1} parent=19 // pred_check
          %p143 = pneg %p51
        $region22: #{tpu_custom_call.1} parent=19 // pred_check_branch
          %145 = sbr.rel (%p143) target = $region24
        $region23: #{tpu_custom_call.1} parent=19 // pred_region
          %s146 = sand.u32 %s41, 1
          %s147 = scalar_lea.sflag [#allocation5], %s146
          %s148 = sand.u32 %s41, 1
          %s149 = smul.addr %s148, 8
          %s150 = scalar_lea.vmem [#allocation4], %s149
          %s152 = ssub.s32 128, 128
          %153 = vsyncadd %s147, %s152
          %s154 = sadd.s32 %s24, %s25
          %s155 = smul.addr %s154, 128
          %s156 = scalar_lea.hbm %s1, %s155
          %s158 = sshll.u32 %s150, 4
          %s159 = int_to_ptr.vmem [resolvable:$true] %s158
          %161 = dma.hbm_to_vmem [thread:$0]  %s156, 128, %s159, %s147
        $region24: #{tpu_custom_call.1} parent=19 // pred_fallthru
          _
      $region20: #{tpu_custom_call.1} parent=5 // pred_fallthru
        _
      %p162 = scmp.le.s32.totalorder 1, %s17
      %p163 = scmp.lt.s32.totalorder %s17, 3
      %p164 = pnand %p162, %p163
      %p165 = pneg %p164
      // Predicated region
      $region25: #{tpu_custom_call.1} parent=5 // pred_check
        _
      $region26: #{tpu_custom_call.1} parent=5 // pred_check_branch
        %167 = sbr.rel (%p164) target = $region28
      $region27: #{tpu_custom_call.1} parent=5 // pred_region
        %s168 = ssub.s32 %s17, 1
        %s169 = sand.u32 %s44, 1
        %s170 = scalar_lea.sflag [#allocation5], %s169
        %s171 = sand.u32 %s44, 1
        %s172 = smul.addr %s171, 8
        %s173 = scalar_lea.vmem [#allocation4], %s172
        // Predicated region
        $region29: #{tpu_custom_call.1} parent=27 // pred_check
          %p174 = pneg %p57
        $region30: #{tpu_custom_call.1} parent=27 // pred_check_branch
          %176 = sbr.rel (%p174) target = $region32
        $region31: #{tpu_custom_call.1} parent=27 // pred_region
          %177 = dma.done %s170, 128
        $region32: #{tpu_custom_call.1} parent=27 // pred_fallthru
          _
        // Predicated region
        $region33: #{tpu_custom_call.1} parent=27 // pred_check
          %p178 = pneg %p83
        $region34: #{tpu_custom_call.1} parent=27 // pred_check_branch
          %180 = sbr.rel (%p178) target = $region36
        $region35: #{tpu_custom_call.1} parent=27 // pred_region
          %181 = dma.done [#allocation8], 128
        $region36: #{tpu_custom_call.1} parent=27 // pred_fallthru
          _
        %s182 = sand.u32 %s44, 1
        %s183 = scalar_lea.sflag [#allocation5], %s182
        %s184 = sand.u32 %s44, 1
        %s185 = smul.addr %s184, 8
        %s186 = scalar_lea.vmem [#allocation4], %s185
        %p187 = pneg %p57
        %p188 = pneg %p54
        %p189 = pneg %p83
        %p190 = pneg %p80
        %p191 = pneg %p111
        %p192 = pneg %p108
        %s193 = sand.u32 %s98, 1
        %s194 = scalar_lea.sflag [#allocation6], %s193
        %s195 = sand.u32 %s98, 1
        %s196 = smul.addr %s195, 8
        %s197 = scalar_lea.vmem [#allocation9], %s196
        %v198 = vld [vmem:[%s173] sm:$0xff]
        %v199 = vld [vmem:[#allocation7] sm:$0xff]
        %v200 = vadd.f32 %v198, %v199
        %s201 = smul.u32 %s26, 2
        %s202 = sadd.s32 %s201, %s27
        %v203 = vlaneseq
        %v204 = vshrl.u32 %v203, 7
        %v205 = vlaneseq
        %v206 = vand.u32 %v205, 127
        %v207 = vmul.u32 %v204, 32
        %v208 = vadd.s32 %v207, %v206
        %s209 = sld [smem:[#allocation3]]
        %s210 = smul.u32 %s202, 2654435769
        %s211 = sadd.s32 %s209, %s210
        %v212 = vstv %s211
        %v213 = vxor.u32 %v208, %v212
        %v214 = vshrl.u32 %v213, 16
        %v215 = vxor.u32 %v213, %v214
        %v216 = vmul.u32 %v215, 2146121005
        %v217 = vshrl.u32 %v216, 15
        %v218 = vxor.u32 %v216, %v217
        %v219 = vmul.u32 %v218, 2221713035
        %v220 = vshrl.u32 %v219, 16
        %v221 = vxor.u32 %v219, %v220
        %v222 = vshrl.u32 %v221, 8
        %vm223 = vcmp.ge.s32.totalorder %v222, 1677722
        %v224 = vmul.f32 %v200, 1.1111112
        %v225 = vsel %vm223, %v224, 0.0
        %vm226 = vcmask 261120
        %227 = vst.msk [vmem:[%s197] sm:$0xff] %vm226, %v225
        %s228 = sand.u32 %s98, 1
        %s229 = scalar_lea.sflag [#allocation6], %s228
        %s230 = sand.u32 %s98, 1
        %s231 = smul.addr %s230, 8
        %s232 = scalar_lea.vmem [#allocation9], %s231
        // Predicated region
        $region37: #{tpu_custom_call.1} parent=27 // pred_check
          %p233 = pneg %p108
        $region38: #{tpu_custom_call.1} parent=27 // pred_check_branch
          %235 = sbr.rel (%p233) target = $region40
        $region39: #{tpu_custom_call.1} parent=27 // pred_region
          %s237 = ssub.s32 128, 128
          %238 = vsyncadd %s229, %s237
          %s239 = sadd.s32 %s26, %s27
          %s240 = smul.addr %s239, 128
          %s241 = scalar_lea.hbm %s3, %s240
          %s243 = sshll.u32 %s232, 4
          %s244 = int_to_ptr.vmem [resolvable:$true] %s243
          %246 = dma.vmem_to_hbm [thread:$0]  %s244, 128, %s241, %s229
        $region40: #{tpu_custom_call.1} parent=27 // pred_fallthru
          _
      $region28: #{tpu_custom_call.1} parent=5 // pred_fallthru
        _
      %p247 = scmp.le.s32.totalorder 2, %s17
      // Predicated region
      $region41: #{tpu_custom_call.1} parent=5 // pred_check
        %p248 = pneg %p247
      $region42: #{tpu_custom_call.1} parent=5 // pred_check_branch
        %250 = sbr.rel (%p248) target = $region44
      $region43: #{tpu_custom_call.1} parent=5 // pred_region
        %s251 = ssub.s32 %s17, 2
        // Predicated region
        $region45: #{tpu_custom_call.1} parent=43 // pred_check
          %p252 = pneg %p114
        $region46: #{tpu_custom_call.1} parent=43 // pred_check_branch
          %254 = sbr.rel (%p252) target = $region48
        $region47: #{tpu_custom_call.1} parent=43 // pred_region
          %s255 = sand.u32 %s99, 1
          %s256 = scalar_lea.sflag [#allocation6], %s255
          %s257 = sand.u32 %s99, 1
          %s258 = smul.addr %s257, 8
          %s259 = scalar_lea.vmem [#allocation9], %s258
          %260 = dma.done %s256, 128
        $region48: #{tpu_custom_call.1} parent=43 // pred_fallthru
          _
      $region44: #{tpu_custom_call.1} parent=5 // pred_fallthru
        _
    $region6: #{tpu_custom_call.1} parent=1 // loop_footer
      %s21 = sadd.s32 1, %s17
    $region7: #{tpu_custom_call.1} parent=1 // loop_footer_branch
      %16 = sbr.rel target = $region3
    $region8: #{tpu_custom_call.1} parent=1 // loop_exit
      _
    %261 = vsyncpa [#allocation5], 1
    %s262 = scalar_lea.sflag [#allocation5], 1
    %263 = vsyncpa %s262, 1
    %264 = vsyncpa [#allocation8], 1
    %265 = vsyncpa [#allocation6], 1
    %s266 = scalar_lea.sflag [#allocation6], 1
    %267 = vsyncpa %s266, 1

</llo_original>
